<compile_context>
chip_gen: v7x
topology: tpu7x:2x2x1
jax: 0.10.0
libtpu: 0.0.40
codegen_flags: <defaults>
</compile_context>

<pallas_src>
import jax
import jax.numpy as jnp
from jax.experimental import pallas as pl
from jax.experimental.pallas import tpu as pltpu


# ------------------------------ helpers ----------------------------------- #

_TM_MAX = 1024     # max rows per grid step (~3 MiB/step VMEM at these widths)
_MIN_STEPS = 4     # keep >= 4 M-steps so both v7x TCs get work + overlap
_LANES = 128


def _round_up(x, m):
    return ((x + m - 1) // m) * m


def _plan_packing(n_cols):
    """How many tokens to pack per kernel row so the store is lane-dense."""
    if n_cols % _LANES == 0:
        return 1                       # already lane-dense
    if _LANES % n_cols == 0:
        r = _LANES // n_cols
        if r <= 8:                     # keep the block-diagonal weight sane
            return r
    return 1                           # fall back: full-dim block, masked vst


def _pack_weight(w_mat, b_vec, r):
    """Block-diagonal weight / tiled bias for projecting r packed tokens."""
    K, n = w_mat.shape
    if r == 1:
        return w_mat, b_vec[None, :].astype(jnp.float32)
    w = jnp.zeros((r * K, r * n), w_mat.dtype)
    for t in range(r):
        w = w.at[t * K:(t + 1) * K, t * n:(t + 1) * n].set(w_mat)
    b = jnp.tile(b_vec, r)[None, :].astype(jnp.float32)
    return w, b


# ----------------------------- Pallas kernel ------------------------------ #

def _proj_kernel(x_ref, w_ref, b_ref, o_ref):
    # x_ref: (tm, K) f32, w_ref: (K, N) bf16, b_ref: (1, N) f32,
    # o_ref: (tm, N) f32.  bf16 cast in-kernel; f32 accumulation on the MXU.
    x = x_ref[...].astype(jnp.bfloat16)
    acc = jnp.dot(x, w_ref[...], preferred_element_type=jnp.float32)
    o_ref[...] = (acc + b_ref[...]).astype(o_ref.dtype)


def _token_projection(x2d, w_mat, bias_row):
    """(M, K) f32 @ (K, N) bf16 + bias -> (M, N) f32, tiled over M."""
    M, K = x2d.shape
    Kw, N = w_mat.shape
    assert K == Kw and bias_row.shape == (1, N)

    # >= _MIN_STEPS grid steps when M is small, <= _TM_MAX rows per step when
    # M is large; multiple of 16 rows, partial last block masked by Pallas.
    tm = min(_TM_MAX, max(16, _round_up(pl.cdiv(M, _MIN_STEPS), 16)))
    grid_m = pl.cdiv(M, tm)

    return pl.pallas_call(
        _proj_kernel,
        out_shape=jax.ShapeDtypeStruct((M, N), jnp.float32),
        grid_spec=pltpu.PrefetchScalarGridSpec(
            num_scalar_prefetch=0,
            grid=(grid_m,),
            in_specs=[
                pl.BlockSpec((tm, K), lambda i: (i, 0)),    # f32 activations
                # Constant block index -> fetched once, resident in VMEM.
                pl.BlockSpec((K, N), lambda i: (0, 0)),     # bf16 weight
                pl.BlockSpec((1, N), lambda i: (0, 0)),     # f32 bias
            ],
            out_specs=pl.BlockSpec((tm, N), lambda i: (i, 0)),
        ),
        compiler_params=pltpu.CompilerParams(
            dimension_semantics=("parallel",),   # shard M steps across v7x TCs
            vmem_limit_bytes=32 * 1024 * 1024,   # >> ~3 MiB/step actual need
        ),
    )(x2d, w_mat, bias_row)


def _project_tokens(x2d, w_mat, bias_row, r, n_valid):
    """Project M tokens, packing r tokens per kernel row; returns (M, n_valid)."""
    M, K = x2d.shape
    if r == 1:
        return _token_projection(x2d, w_mat, bias_row)
    pad = (-M) % r
    if pad:
        x2d = jnp.pad(x2d, ((0, pad), (0, 0)))
    xp = x2d.reshape((M + pad) // r, r * K)          # free contiguous reshape
    out = _token_projection(xp, w_mat, bias_row)     # (Mp/r, r*n_valid)
    out = out.reshape(M + pad, n_valid)              # free contiguous reshape
    return out[:M] if pad else out


# --------------------------- PatchRecovery module -------------------------- #

class PatchRecovery:
    """JAX/Pallas equivalent of mfai's PatchRecovery (stride == kernel)."""

    def __init__(self, dim, patch_size, plevel_channels=5, surface_channels=4,
                 key=None, dtype=jnp.float32, compute_dtype=jnp.bfloat16):
        self.dim = dim
        self.patch_size = patch_size
        self.plevel_channels = plevel_channels
        self.surface_channels = surface_channels
        self.compute_dtype = compute_dtype
        pZ, pH, pW = patch_size

        if key is None:
            key = jax.random.PRNGKey(0)
        k1, k2, k3, k4 = jax.random.split(key, 4)

        # ConvTranspose3d weight: (in=dim, out=plevel, pZ, pH, pW)
        self.w3 = jax.random.normal(k1, (dim, plevel_channels, pZ, pH, pW),
                                    dtype) * 0.02
        self.b3 = jax.random.normal(k2, (plevel_channels,), dtype) * 0.02
        # ConvTranspose2d weight: (in=dim, out=surface, pH, pW)
        self.w2 = jax.random.normal(k3, (dim, surface_channels, pH, pW),
                                    dtype) * 0.02
        self.b2 = jax.random.normal(k4, (surface_channels,), dtype) * 0.02

        # Flattened matmul forms, columns ordered (o, kz, kh, kw) / (o, kh, kw).
        # No lane padding; when n_cols divides 128 we instead pack r tokens per
        # kernel row via a block-diagonal weight so the store is lane-dense.
        self.n3 = plevel_channels * pZ * pH * pW
        self.n2 = surface_channels * pH * pW
        self.r3 = _plan_packing(self.n3)
        self.r2 = _plan_packing(self.n2)

        w3_flat = self.w3.reshape(dim, self.n3).astype(compute_dtype)
        b3_flat = jnp.repeat(self.b3, pZ * pH * pW).astype(jnp.float32)
        self.w3_mat, self.b3_row = _pack_weight(w3_flat, b3_flat, self.r3)

        w2_flat = self.w2.reshape(dim, self.n2).astype(compute_dtype)
        b2_flat = jnp.repeat(self.b2, pH * pW).astype(jnp.float32)
        self.w2_mat, self.b2_row = _pack_weight(w2_flat, b2_flat, self.r2)

    def __call__(self, x, embedding_shape):
        """x: (B, L, C) tokens, embedding_shape: (B, Z, H, W)."""
        B = x.shape[0]
        Z, H, W = embedding_shape[1], embedding_shape[2], embedding_shape[3]
        C = self.dim
        pZ, pH, pW = self.patch_size
        Op, Os = self.plevel_channels, self.surface_channels

        x = x.reshape(B, Z, H, W, C)                       # (B, Z, H, W, C)

        # ---- pressure-level branch: tokens with z in [0, Z-1) ----
        x_pl = x[:, :Z - 1].reshape(B * (Z - 1) * H * W, C)   # f32; cast in-kernel
        out_pl = _project_tokens(x_pl, self.w3_mat, self.b3_row,
                                 self.r3, self.n3)             # (M, n3), no pad cols
        out_pl = out_pl.reshape(B, Z - 1, H, W, Op, pZ, pH, pW)  # free reshape
        out_pl = out_pl.transpose(0, 4, 1, 5, 2, 6, 3, 7)        # single XLA pass
        output_plevel = out_pl.reshape(B, Op, (Z - 1) * pZ, H * pH, W * pW)

        # ---- surface branch: tokens at z == Z-1 ----
        x_sf = x[:, Z - 1].reshape(B * H * W, C)
        out_sf = _project_tokens(x_sf, self.w2_mat, self.b2_row,
                                 self.r2, self.n2)             # (M, n2)
        out_sf = out_sf.reshape(B, H, W, Os, pH, pW)
        out_sf = out_sf.transpose(0, 3, 1, 4, 2, 5)
        output_surface = out_sf.reshape(B, Os, H * pH, W * pW)

        return output_plevel, output_surface


# -------------------------------- reference -------------------------------- #

def _reference(module, x, embedding_shape):
    """Pure-jnp reference of the stride==kernel transposed convolutions.

    Applies the same bf16 rounding of activations / weights as the kernel
    (f32 accumulation), so comparison tolerances stay tight.
    """
    B = x.shape[0]
    Z, H, W = embedding_shape[1], embedding_shape[2], embedding_shape[3]
    pZ, pH, pW = module.patch_size
    Op, Os = module.plevel_channels, module.surface_channels
    cd = module.compute_dtype
    hp = jax.lax.Precision.HIGHEST

    xq = x.astype(cd).astype(jnp.float32)
    w3 = module.w3.astype(cd).astype(jnp.float32)
    w2 = module.w2.astype(cd).astype(jnp.float32)

    xq = xq.reshape(B, Z, H, W, module.dim)
    x_pl = xq[:, :Z - 1]                                   # (B, Z-1, H, W, C)
    out_pl = jnp.einsum("bzhwc,coijk->bozihjwk", x_pl, w3, precision=hp)
    out_pl = out_pl + module.b3[None, :, None, None, None, None, None, None]
    out_pl = out_pl.reshape(B, Op, (Z - 1) * pZ, H * pH, W * pW)

    x_sf = xq[:, Z - 1]                                    # (B, H, W, C)
    out_sf = jnp.einsum("bhwc,cojk->bohjwk", x_sf, w2, precision=hp)
    out_sf = out_sf + module.b2[None, :, None, None, None, None]
    out_sf = out_sf.reshape(B, Os, H * pH, W * pW)
    return out_pl, out_sf


# ---------------------------------- main ----------------------------------- #

if __name__ == "__main__":
    # Small but non-trivial shapes: the plevel branch has M = 2*2*18*32 = 2304
    # tokens -> 4 grid steps of 576 rows; the surface branch packs 2 tokens per
    # row (n2 = 64 -> lane-dense 128-wide stores) giving 576 rows -> 4 steps.
    B, dim = 2, 32
    Z, H, W = 3, 18, 32
    patch_size = (2, 4, 4)
    plevel_channels, surface_channels = 5, 4

    key = jax.random.PRNGKey(0)
    kx, kp = jax.random.split(key)
    x = jax.random.normal(kx, (B, Z * H * W, dim), jnp.float32)
    embedding_shape = (B, Z, H, W)

    module = PatchRecovery(dim, patch_size, plevel_channels, surface_channels,
                           key=kp)

    out_plevel, out_surface = module(x, embedding_shape)
    jax.block_until_ready(out_plevel)
    jax.block_until_ready(out_surface)

    ref_plevel, ref_surface = _reference(module, x, embedding_shape)
    assert out_plevel.shape == (B, plevel_channels, (Z - 1) * patch_size[0],
                                H * patch_size[1], W * patch_size[2])
    assert out_surface.shape == (B, surface_channels,
                                 H * patch_size[1], W * patch_size[2])
    assert jnp.allclose(out_plevel, ref_plevel, atol=2e-4, rtol=2e-4)
    assert jnp.allclose(out_surface, ref_surface, atol=2e-4, rtol=2e-4)

    print("KERNEL_OK")
</pallas_src>

<mosaic_0001>
module attributes {stable_mosaic.version = 11 : i64} {
  func.func @_proj_kernel(%arg0: i32, %arg1: memref<576x32xf32, #tpu.memory_space<vmem>>, %arg2: memref<32x160xbf16, #tpu.memory_space<vmem>>, %arg3: memref<1x160xf32, #tpu.memory_space<vmem>>, %arg4: memref<576x160xf32, #tpu.memory_space<vmem>>) attributes {dimension_semantics = [#tpu.dimension_semantics<parallel>], iteration_bounds = array<i64: 4>, scalar_prefetch = 0 : i64, scratch_operands = 0 : i64, tpu.core_type = #tpu.core_type<tc>, window_params = [{transform_indices = @transform_0, window_bounds = array<i64: 576, 32>}, {pipeline_mode = #tpu.pipeline_mode<synchronous>, transform_indices = @transform_1, window_bounds = array<i64: 32, 160>}, {pipeline_mode = #tpu.pipeline_mode<synchronous>, transform_indices = @transform_2, window_bounds = array<i64: 1, 160>}, {transform_indices = @transform_3, window_bounds = array<i64: 576, 160>}]} {
    %c0 = arith.constant 0 : index
    %c0_0 = arith.constant 0 : index
    %0 = vector.load %arg1[%c0, %c0_0] : memref<576x32xf32, #tpu.memory_space<vmem>>, vector<576x32xf32>
    %1 = arith.truncf %0 : vector<576x32xf32> to vector<576x32xbf16>
    %c0_1 = arith.constant 0 : index
    %c0_2 = arith.constant 0 : index
    %2 = vector.load %arg2[%c0_1, %c0_2] : memref<32x160xbf16, #tpu.memory_space<vmem>>, vector<32x160xbf16>
    %cst = arith.constant dense<0.000000e+00> : vector<576x160xf32>
    %3 = tpu.matmul %1, %2, %cst {dimension_numbers = #tpu.dot_dimension_numbers<[1], [0], [0], [1], [0, 0, 1, 1], [], []>} : vector<576x32xbf16>, vector<32x160xbf16>, vector<576x160xf32> -> vector<576x160xf32>
    %c0_3 = arith.constant 0 : index
    %c0_4 = arith.constant 0 : index
    %4 = vector.load %arg3[%c0_3, %c0_4] : memref<1x160xf32, #tpu.memory_space<vmem>>, vector<1x160xf32>
    %5 = vector.broadcast %4 : vector<1x160xf32> to vector<576x160xf32>
    %6 = arith.addf %3, %5 : vector<576x160xf32>
    %c0_5 = arith.constant 0 : index
    %c0_6 = arith.constant 0 : index
    %7 = vector.load %arg4[%c0_5, %c0_6] : memref<576x160xf32, #tpu.memory_space<vmem>>, vector<576x160xf32>
    tpu.vector_store %arg4[%c0_5, %c0_6], %6 {strides = array<i32>} : memref<576x160xf32, #tpu.memory_space<vmem>>, vector<576x160xf32>,
    return
  }
  func.func @transform_0(%arg0: i32) -> (i32, i32) {
    %c0_i32 = arith.constant 0 : i32
    %c0_i32_0 = arith.constant 0 : i32
    return %arg0, %c0_i32 : i32, i32
  }
  func.func @transform_1(%arg0: i32) -> (i32, i32) {
    %c0_i32 = arith.constant 0 : i32
    %c0_i32_0 = arith.constant 0 : i32
    %c0_i32_1 = arith.constant 0 : i32
    return %c0_i32, %c0_i32_0 : i32, i32
  }
  func.func @transform_2(%arg0: i32) -> (i32, i32) {
    %c0_i32 = arith.constant 0 : i32
    %c0_i32_0 = arith.constant 0 : i32
    %c0_i32_1 = arith.constant 0 : i32
    return %c0_i32, %c0_i32_0 : i32, i32
  }
  func.func @transform_3(%arg0: i32) -> (i32, i32) {
    %c0_i32 = arith.constant 0 : i32
    %c0_i32_0 = arith.constant 0 : i32
    return %arg0, %c0_i32 : i32, i32
  }
}

</mosaic_0001>

<llo_original>
// kernel: tpu_custom_call.1
$region0: #{tpu_custom_call.1}
  #allocation0 [shape = 'u32[]', space=smem, size = 0x4, offset = 0x4, fixed_abs, tag = 'smem constant byte address 0x4 - core index']
  #allocation1 [shape = 'u32[144,128]{1,0:T(1,128)}', space=vmem, size = 0x12000, scoped, tag = 'internal scratch']
  %s0 = inlined_call_operand.vmem [shape: f32[2304,32], index: 0, kind: input, shape index: {}]
  %s1 = inlined_call_operand.vmem [shape: bf16[32,160], index: 1, kind: input, shape index: {}]
  %s2 = inlined_call_operand.vmem [shape: f32[1,160], index: 2, kind: input, shape index: {}]
  %s3 = inlined_call_operand.vmem [shape: f32[2304,160], index: 3, kind: output, shape index: {}]
  %s4 = sld [smem:[#allocation0]]
  $region45: #{tpu_custom_call.1} parent=0
    _
  %s6 = ssub.s32 1, %s4
  %s7 = scalar_select 0, %s6, %s4
  loop: start=0, step=1, limit=6
  $region2: #{tpu_custom_call.1} parent=0 // loop_pre_header
    _
  $region3: #{tpu_custom_call.1} parent=0 // loop_header
    %s9 = sphi 0, %s13
    %p10 = scmp.ge.s32.totalorder %s9, 6
    %s19 = sphi 0, %s21
    %s22 = sphi 0, %s19
    %s23 = sphi 0, %s22
    %s39 = sphi 0, %s23
    %s43 = sphi 0, %s43
    %s45 = sphi 0, %s43
    %s46 = sphi 0, %s45
    %s60 = sphi 0, %s46
    %s64 = sphi 0, %s64
    %s66 = sphi 0, %s64
    %s67 = sphi 0, %s66
    %s81 = sphi 0, %s67
    %s87 = sphi 0, %s89
    %s90 = sphi 0, %s87
    %s91 = sphi 0, %s90
    %s107 = sphi 0, %s91
  $region4: #{tpu_custom_call.1} parent=0 // loop_header_branch
    %12 = sbr.rel (%p10) target = $region8
  $region5: #{tpu_custom_call.1} parent=0 // loop_body
    %s14 = ssub.s32 %s9, 1
    %s15 = ssub.s32 %s9, 2
    %s16 = sadd.s32 %s9, 1
    %s17 = ssub.s32 %s9, %s16
    %p18 = scmp.eq.s32.totalorder %s17, 0
    %s20 = sadd.s32 %s19, 1
    %s21 = scalar_select %p18, %s19, %s20
    %p24 = pneg %p18
    %p25 = scmp.eq.s32.totalorder %s9, 3
    %p26 = por %p24, %p25
    %p27 = scmp.ne.s32.totalorder %s19, %s22
    %p28 = scmp.eq.s32.totalorder %s9, 0
    %p29 = por %p27, %p28
    %p30 = scmp.ne.s32.totalorder %s19, %s22
    %p31 = scmp.eq.s32.totalorder %s14, 3
    %p32 = por %p30, %p31
    %p33 = scmp.ne.s32.totalorder %s22, %s23
    %p34 = scmp.eq.s32.totalorder %s14, 0
    %p35 = por %p33, %p34
    %p36 = scmp.ne.s32.totalorder %s22, %s23
    %p37 = scmp.eq.s32.totalorder %s15, 3
    %p38 = por %p36, %p37
    %p40 = scmp.ne.s32.totalorder %s23, %s39
    %p41 = scmp.eq.s32.totalorder %s15, 0
    %p42 = por %p40, %p41
    %s44 = sadd.s32 %s43, 1
    %p47 = scmp.eq.s32.totalorder %s9, 3
    %p48 = scmp.ne.s32.totalorder %s43, %s45
    %p49 = scmp.eq.s32.totalorder %s9, 0
    %p50 = por %p48, %p49
    %p51 = scmp.ne.s32.totalorder %s43, %s45
    %p52 = scmp.eq.s32.totalorder %s14, 3
    %p53 = por %p51, %p52
    %p54 = scmp.ne.s32.totalorder %s45, %s46
    %p55 = scmp.eq.s32.totalorder %s14, 0
    %p56 = por %p54, %p55
    %p57 = scmp.ne.s32.totalorder %s45, %s46
    %p58 = scmp.eq.s32.totalorder %s15, 3
    %p59 = por %p57, %p58
    %p61 = scmp.ne.s32.totalorder %s46, %s60
    %p62 = scmp.eq.s32.totalorder %s15, 0
    %p63 = por %p61, %p62
    %s65 = sadd.s32 %s64, 1
    %p68 = scmp.eq.s32.totalorder %s9, 3
    %p69 = scmp.ne.s32.totalorder %s64, %s66
    %p70 = scmp.eq.s32.totalorder %s9, 0
    %p71 = por %p69, %p70
    %p72 = scmp.ne.s32.totalorder %s64, %s66
    %p73 = scmp.eq.s32.totalorder %s14, 3
    %p74 = por %p72, %p73
    %p75 = scmp.ne.s32.totalorder %s66, %s67
    %p76 = scmp.eq.s32.totalorder %s14, 0
    %p77 = por %p75, %p76
    %p78 = scmp.ne.s32.totalorder %s66, %s67
    %p79 = scmp.eq.s32.totalorder %s15, 3
    %p80 = por %p78, %p79
    %p82 = scmp.ne.s32.totalorder %s67, %s81
    %p83 = scmp.eq.s32.totalorder %s15, 0
    %p84 = por %p82, %p83
    %s85 = ssub.s32 %s9, %s16
    %p86 = scmp.eq.s32.totalorder %s85, 0
    %s88 = sadd.s32 %s87, 1
    %s89 = scalar_select %p86, %s87, %s88
    %p92 = pneg %p86
    %p93 = scmp.eq.s32.totalorder %s9, 3
    %p94 = por %p92, %p93
    %p95 = scmp.ne.s32.totalorder %s87, %s90
    %p96 = scmp.eq.s32.totalorder %s9, 0
    %p97 = por %p95, %p96
    %p98 = scmp.ne.s32.totalorder %s87, %s90
    %p99 = scmp.eq.s32.totalorder %s14, 3
    %p100 = por %p98, %p99
    %p101 = scmp.ne.s32.totalorder %s90, %s91
    %p102 = scmp.eq.s32.totalorder %s14, 0
    %p103 = por %p101, %p102
    %p104 = scmp.ne.s32.totalorder %s90, %s91
    %p105 = scmp.eq.s32.totalorder %s15, 3
    %p106 = por %p104, %p105
    %p108 = scmp.ne.s32.totalorder %s91, %s107
    %p109 = scmp.eq.s32.totalorder %s15, 0
    %p110 = por %p108, %p109
    %p111 = scmp.le.s32.totalorder 1, %s9
    %p112 = scmp.lt.s32.totalorder %s9, 5
    %p113 = pnand %p111, %p112
    %p114 = pneg %p113
    // Predicated region
    $region9: #{tpu_custom_call.1} parent=5 // pred_check
      _
    $region10: #{tpu_custom_call.1} parent=5 // pred_check_branch
      %116 = sbr.rel (%p113) target = $region12
    $region11: #{tpu_custom_call.1} parent=5 // pred_region
      %s117 = ssub.s32 %s9, 1
      // Predicated region
      $region13: #{tpu_custom_call.1} parent=11 // pred_check
        %p118 = pneg %p56
      $region14: #{tpu_custom_call.1} parent=11 // pred_check_branch
        %120 = sbr.rel (%p118) target = $region16
      $region15: #{tpu_custom_call.1} parent=11 // pred_region
        _
      $region16: #{tpu_custom_call.1} parent=11 // pred_fallthru
        _
      // Predicated region
      $region17: #{tpu_custom_call.1} parent=11 // pred_check
        %p121 = pneg %p77
      $region18: #{tpu_custom_call.1} parent=11 // pred_check_branch
        %123 = sbr.rel (%p121) target = $region20
      $region19: #{tpu_custom_call.1} parent=11 // pred_region
        _
      $region20: #{tpu_custom_call.1} parent=11 // pred_fallthru
        _
    $region12: #{tpu_custom_call.1} parent=5 // pred_fallthru
      _
    %p124 = scmp.lt.s32.totalorder %s9, 4
    // Predicated region
    $region21: #{tpu_custom_call.1} parent=5 // pred_check
      %p125 = pneg %p124
    $region22: #{tpu_custom_call.1} parent=5 // pred_check_branch
      %127 = sbr.rel (%p125) target = $region24
    $region23: #{tpu_custom_call.1} parent=5 // pred_region
      // Predicated region
      $region25: #{tpu_custom_call.1} parent=23 // pred_check
        %p128 = pneg %p29
      $region26: #{tpu_custom_call.1} parent=23 // pred_check_branch
        %130 = sbr.rel (%p128) target = $region28
      $region27: #{tpu_custom_call.1} parent=23 // pred_region
        %s131 = smul.u32 72, %s9
        %p132 = scmp.lt.s32.totalorder %s131, 287
        %s133 = scalar_select %p132, %s131, 287
        %s134 = smul.addr %s133, 8
        %s135 = scalar_lea.vmem %s0, %s134
        %s136 = smul.u32 72, %s9
      $region28: #{tpu_custom_call.1} parent=23 // pred_fallthru
        _
    $region24: #{tpu_custom_call.1} parent=5 // pred_fallthru
      _
    %p137 = scmp.le.s32.totalorder 1, %s9
    %p138 = scmp.lt.s32.totalorder %s9, 5
    %p139 = pnand %p137, %p138
    %p140 = pneg %p139
    // Predicated region
    $region29: #{tpu_custom_call.1} parent=5 // pred_check
      _
    $region30: #{tpu_custom_call.1} parent=5 // pred_check_branch
      %142 = sbr.rel (%p139) target = $region32
    $region31: #{tpu_custom_call.1} parent=5 // pred_region
      %s143 = ssub.s32 %s9, 1
      %s144 = smul.u32 72, %s14
      %p145 = scmp.lt.s32.totalorder %s144, 287
      %s146 = scalar_select %p145, %s144, 287
      %s147 = smul.addr %s146, 8
      %s148 = scalar_lea.vmem %s0, %s147
      %p149 = pneg %p35
      %p150 = pneg %p32
      %p151 = pneg %p56
      %p152 = pneg %p53
      %p153 = pneg %p77
      %p154 = pneg %p74
      %p155 = pneg %p103
      %p156 = pneg %p100
      %s157 = smul.u32 72, %s14
      %p158 = scmp.lt.s32.totalorder %s157, 287
      %s159 = scalar_select %p158, %s157, 287
      %s160 = smul.addr %s159, 2
      %s161 = smul.addr %s160, 8
      %s162 = scalar_lea.vmem %s3, %s161
      %s163 = smul.u32 72, %s14
      %p164 = scmp.lt.s32.totalorder %s163, 287
      %s165 = scalar_select %p164, %s163, 287
      %s166 = smul.addr %s165, 8
      %s167 = scalar_lea.vmem %s0, %s166
      %s168 = smul.u32 72, %s14
      %s169 = smul.u32 72, %s14
      %p170 = scmp.lt.s32.totalorder %s169, 287
      %s171 = scalar_select %p170, %s169, 287
      %s172 = smul.addr %s171, 2
      %s173 = smul.addr %s172, 8
      %s174 = scalar_lea.vmem %s3, %s173
      %s175 = smul.u32 72, %s14
      %v177 = vld [vmem:[%s167] sm:$0xff]
      %v178 = vld [vmem:[%s167 + $0x8] sm:$0xff]
      %v179 = vld [vmem:[%s167 + $0x10] sm:$0xff]
      %v180 = vld [vmem:[%s167 + $0x18] sm:$0xff]
      %v181 = vld [vmem:[%s167 + $0x20] sm:$0xff]
      %v182 = vld [vmem:[%s167 + $0x28] sm:$0xff]
      %v183 = vld [vmem:[%s167 + $0x30] sm:$0xff]
      %v184 = vld [vmem:[%s167 + $0x38] sm:$0xff]
      %v185 = vld [vmem:[%s167 + $0x40] sm:$0xff]
      %v186 = vld [vmem:[%s167 + $0x48] sm:$0xff]
      %v187 = vld [vmem:[%s167 + $0x50] sm:$0xff]
      %v188 = vld [vmem:[%s167 + $0x58] sm:$0xff]
      %v189 = vld [vmem:[%s167 + $0x60] sm:$0xff]
      %v190 = vld [vmem:[%s167 + $0x68] sm:$0xff]
      %v191 = vld [vmem:[%s167 + $0x70] sm:$0xff]
      %v192 = vld [vmem:[%s167 + $0x78] sm:$0xff]
      %v193 = vld [vmem:[%s167 + $0x80] sm:$0xff]
      %v194 = vld [vmem:[%s167 + $0x88] sm:$0xff]
      %v195 = vld [vmem:[%s167 + $0x90] sm:$0xff]
      %v196 = vld [vmem:[%s167 + $0x98] sm:$0xff]
      %v197 = vld [vmem:[%s167 + $0xa0] sm:$0xff]
      %v198 = vld [vmem:[%s167 + $0xa8] sm:$0xff]
      %v199 = vld [vmem:[%s167 + $0xb0] sm:$0xff]
      %v200 = vld [vmem:[%s167 + $0xb8] sm:$0xff]
      %v201 = vld [vmem:[%s167 + $0xc0] sm:$0xff]
      %v202 = vld [vmem:[%s167 + $0xc8] sm:$0xff]
      %v203 = vld [vmem:[%s167 + $0xd0] sm:$0xff]
      %v204 = vld [vmem:[%s167 + $0xd8] sm:$0xff]
      %v205 = vld [vmem:[%s167 + $0xe0] sm:$0xff]
      %v206 = vld [vmem:[%s167 + $0xe8] sm:$0xff]
      %v207 = vld [vmem:[%s167 + $0xf0] sm:$0xff]
      %v208 = vld [vmem:[%s167 + $0xf8] sm:$0xff]
      %v209 = vld [vmem:[%s167 + $0x100] sm:$0xff]
      %v210 = vld [vmem:[%s167 + $0x108] sm:$0xff]
      %v211 = vld [vmem:[%s167 + $0x110] sm:$0xff]
      %v212 = vld [vmem:[%s167 + $0x118] sm:$0xff]
      %v213 = vld [vmem:[%s167 + $0x120] sm:$0xff]
      %v214 = vld [vmem:[%s167 + $0x128] sm:$0xff]
      %v215 = vld [vmem:[%s167 + $0x130] sm:$0xff]
      %v216 = vld [vmem:[%s167 + $0x138] sm:$0xff]
      %v217 = vld [vmem:[%s167 + $0x140] sm:$0xff]
      %v218 = vld [vmem:[%s167 + $0x148] sm:$0xff]
      %v219 = vld [vmem:[%s167 + $0x150] sm:$0xff]
      %v220 = vld [vmem:[%s167 + $0x158] sm:$0xff]
      %v221 = vld [vmem:[%s167 + $0x160] sm:$0xff]
      %v222 = vld [vmem:[%s167 + $0x168] sm:$0xff]
      %v223 = vld [vmem:[%s167 + $0x170] sm:$0xff]
      %v224 = vld [vmem:[%s167 + $0x178] sm:$0xff]
      %v225 = vld [vmem:[%s167 + $0x180] sm:$0xff]
      %v226 = vld [vmem:[%s167 + $0x188] sm:$0xff]
      %v227 = vld [vmem:[%s167 + $0x190] sm:$0xff]
      %v228 = vld [vmem:[%s167 + $0x198] sm:$0xff]
      %v229 = vld [vmem:[%s167 + $0x1a0] sm:$0xff]
      %v230 = vld [vmem:[%s167 + $0x1a8] sm:$0xff]
      %v231 = vld [vmem:[%s167 + $0x1b0] sm:$0xff]
      %v232 = vld [vmem:[%s167 + $0x1b8] sm:$0xff]
      %v233 = vld [vmem:[%s167 + $0x1c0] sm:$0xff]
      %v234 = vld [vmem:[%s167 + $0x1c8] sm:$0xff]
      %v235 = vld [vmem:[%s167 + $0x1d0] sm:$0xff]
      %v236 = vld [vmem:[%s167 + $0x1d8] sm:$0xff]
      %v237 = vld [vmem:[%s167 + $0x1e0] sm:$0xff]
      %v238 = vld [vmem:[%s167 + $0x1e8] sm:$0xff]
      %v239 = vld [vmem:[%s167 + $0x1f0] sm:$0xff]
      %v240 = vld [vmem:[%s167 + $0x1f8] sm:$0xff]
      %v241 = vld [vmem:[%s167 + $0x200] sm:$0xff]
      %v242 = vld [vmem:[%s167 + $0x208] sm:$0xff]
      %v243 = vld [vmem:[%s167 + $0x210] sm:$0xff]
      %v244 = vld [vmem:[%s167 + $0x218] sm:$0xff]
      %v245 = vld [vmem:[%s167 + $0x220] sm:$0xff]
      %v246 = vld [vmem:[%s167 + $0x228] sm:$0xff]
      %v247 = vld [vmem:[%s167 + $0x230] sm:$0xff]
      %v248 = vld [vmem:[%s167 + $0x238] sm:$0xff]
      %v249 = vpack.c.bf16 %v178, %v177
      %v250 = vpack.c.bf16 %v180, %v179
      %v251 = vpack.c.bf16 %v182, %v181
      %v252 = vpack.c.bf16 %v184, %v183
      %v253 = vpack.c.bf16 %v186, %v185
      %v254 = vpack.c.bf16 %v188, %v187
      %v255 = vpack.c.bf16 %v190, %v189
      %v256 = vpack.c.bf16 %v192, %v191
      %v257 = vpack.c.bf16 %v194, %v193
      %v258 = vpack.c.bf16 %v196, %v195
      %v259 = vpack.c.bf16 %v198, %v197
      %v260 = vpack.c.bf16 %v200, %v199
      %v261 = vpack.c.bf16 %v202, %v201
      %v262 = vpack.c.bf16 %v204, %v203
      %v263 = vpack.c.bf16 %v206, %v205
      %v264 = vpack.c.bf16 %v208, %v207
      %v265 = vpack.c.bf16 %v210, %v209
      %v266 = vpack.c.bf16 %v212, %v211
      %v267 = vpack.c.bf16 %v214, %v213
      %v268 = vpack.c.bf16 %v216, %v215
      %v269 = vpack.c.bf16 %v218, %v217
      %v270 = vpack.c.bf16 %v220, %v219
      %v271 = vpack.c.bf16 %v222, %v221
      %v272 = vpack.c.bf16 %v224, %v223
      %v273 = vpack.c.bf16 %v226, %v225
      %v274 = vpack.c.bf16 %v228, %v227
      %v275 = vpack.c.bf16 %v230, %v229
      %v276 = vpack.c.bf16 %v232, %v231
      %v277 = vpack.c.bf16 %v234, %v233
      %v278 = vpack.c.bf16 %v236, %v235
      %v279 = vpack.c.bf16 %v238, %v237
      %v280 = vpack.c.bf16 %v240, %v239
      %v281 = vpack.c.bf16 %v242, %v241
      %v282 = vpack.c.bf16 %v244, %v243
      %v283 = vpack.c.bf16 %v246, %v245
      %v284 = vpack.c.bf16 %v248, %v247
      %v285 = vld [vmem:[%s1] sm:$0xff]
      %v286 = vld [vmem:[%s1 + $0x8] sm:$0xff]
      %v287 = vld [vmem:[%s1 + $0x10] sm:$0xff]
      %v288 = vld [vmem:[%s1 + $0x18] sm:$0xff]
      %v289 = vld [vmem:[%s2] sm:$0x3]
      %v291 = vlaneseq
      %v292 = vshrl.u32 %v291, 7
      %v293 = vsub.s32 0, %v292
      %v294 = vrot.slane %v289, %v293
      %v295 = vlaneseq
      %v296 = vshrl.u32 %v295, 7
      %v297 = vsub.s32 1, %v296
      %v298 = vrot.slane %v289, %v297
      %v305 = vunpack.c.l.b16 %v285
      %v306 = vunpack.c.h.b16 %v285
      %v307 = vunpack.c.l.b16 %v286
      %v308 = vunpack.c.h.b16 %v286
      %v309 = vunpack.c.l.b16 %v287
      %v310 = vunpack.c.h.b16 %v287
      %v311 = vunpack.c.l.b16 %v288
      %v312 = vunpack.c.h.b16 %v288
      %v313 = vpack.c.b16 %v307, %v305
      %v314 = vpack.c.b16 %v308, %v306
      %v315 = vpack.c.b16 %v311, %v309
      %v316 = vpack.c.b16 %v312, %v310
      %vm321 = vcmask 261120
      %v323 = vsel %vm321, %v249, 0
      %v326 = vsel %vm321, %v250, 0
      %v329 = vsel %vm321, %v251, 0
      %v332 = vsel %vm321, %v252, 0
      %v335 = vsel %vm321, %v253, 0
      %v338 = vsel %vm321, %v254, 0
      %v341 = vsel %vm321, %v255, 0
      %v344 = vsel %vm321, %v256, 0
      %v347 = vsel %vm321, %v257, 0
      %v350 = vsel %vm321, %v258, 0
      %v353 = vsel %vm321, %v259, 0
      %v356 = vsel %vm321, %v260, 0
      %v359 = vsel %vm321, %v261, 0
      %v362 = vsel %vm321, %v262, 0
      %v365 = vsel %vm321, %v263, 0
      %v368 = vsel %vm321, %v264, 0
      %v371 = vsel %vm321, %v265, 0
      %v374 = vsel %vm321, %v266, 0
      %v377 = vsel %vm321, %v267, 0
      %v380 = vsel %vm321, %v268, 0
      %v383 = vsel %vm321, %v269, 0
      %v386 = vsel %vm321, %v270, 0
      %v389 = vsel %vm321, %v271, 0
      %v392 = vsel %vm321, %v272, 0
      %v395 = vsel %vm321, %v273, 0
      %v398 = vsel %vm321, %v274, 0
      %v401 = vsel %vm321, %v275, 0
      %v404 = vsel %vm321, %v276, 0
      %v407 = vsel %vm321, %v277, 0
      %v410 = vsel %vm321, %v278, 0
      %v413 = vsel %vm321, %v279, 0
      %v416 = vsel %vm321, %v280, 0
      %v419 = vsel %vm321, %v281, 0
      %v422 = vsel %vm321, %v282, 0
      %v425 = vsel %vm321, %v283, 0
      %v428 = vsel %vm321, %v284, 0
      %430 = vmatprep.subr.bf16.mxu0 %v314
      %431 = vmatpush1.bf16.msra.mxu0 %v313
      %432 = vmatprep.subr.bf16.mxu0 %v316
      %433 = vmatpush1.bf16.msra.mxu0 %v315
      %434 = vmatprep.subr.bf16.mxu0 0
      %435 = vmatpush1.bf16.msra.mxu0 0
      %436 = vmatprep.subr.bf16.mxu0 0
      %437 = vmatpush1.bf16.msra.mxu0 0
      %438 = vmatprep.subr.bf16.mxu0 0
      %439 = vmatpush1.bf16.msra.mxu0 0
      %440 = vmatprep.subr.bf16.mxu0 0
      %441 = vmatpush1.bf16.msra.mxu0 0
      %442 = vmatprep.subr.bf16.mxu0 0
      %443 = vmatpush1.bf16.msra.mxu0 0
      %444 = vmatprep.subr.bf16.mxu0 0
      %445 = vmatpush1.bf16.msra.mxu0 0
      %446 = vmatprep.subr.bf16.mxu0 0
      %447 = vmatpush1.bf16.msra.mxu0 0
      %448 = vmatprep.subr.bf16.mxu0 0
      %449 = vmatpush1.bf16.msra.mxu0 0
      %450 = vmatprep.subr.bf16.mxu0 0
      %451 = vmatpush1.bf16.msra.mxu0 0
      %452 = vmatprep.subr.bf16.mxu0 0
      %453 = vmatpush1.bf16.msra.mxu0 0
      %454 = vmatprep.subr.bf16.mxu0 0
      %455 = vmatpush1.bf16.msra.mxu0 0
      %456 = vmatprep.subr.bf16.mxu0 0
      %457 = vmatpush1.bf16.msra.mxu0 0
      %458 = vmatprep.subr.bf16.mxu0 0
      %459 = vmatpush1.bf16.msra.mxu0 0
      %460 = vmatprep.subr.bf16.mxu0 0
      %461 = vmatpush1.bf16.msra.mxu0 0
      %462 = vmatprep.mubr.bf16.mxu0 0
      %463 = vmatmul.mubr.bf16.gmra.mrb[0].mxu0 %v323
      %v464 = vpop.f32.mrb[0].mxu0
      %v465 = vadd.f32 %v294, %v464
      %v466 = vpop.f32.mrb[0].mxu0
      %v467 = vadd.f32 %v298, %v466
      %v468 = vpop.f32.mrb[0].mxu0
      %v469 = vadd.f32 %v294, %v468
      %v470 = vpop.f32.mrb[0].mxu0
      %v471 = vadd.f32 %v298, %v470
      %472 = vmatprep.mubr.bf16.mxu0 0
      %473 = vmatmul.mubr.bf16.gmra.mrb[0].mxu0 %v326
      %v474 = vpop.f32.mrb[0].mxu0
      %v475 = vadd.f32 %v294, %v474
      %v476 = vpop.f32.mrb[0].mxu0
      %v477 = vadd.f32 %v298, %v476
      %v478 = vpop.f32.mrb[0].mxu0
      %v479 = vadd.f32 %v294, %v478
      %v480 = vpop.f32.mrb[0].mxu0
      %v481 = vadd.f32 %v298, %v480
      %482 = vmatprep.mubr.bf16.mxu0 0
      %483 = vmatmul.mubr.bf16.gmra.mrb[0].mxu0 %v329
      %v484 = vpop.f32.mrb[0].mxu0
      %v485 = vadd.f32 %v294, %v484
      %v486 = vpop.f32.mrb[0].mxu0
      %v487 = vadd.f32 %v298, %v486
      %v488 = vpop.f32.mrb[0].mxu0
      %v489 = vadd.f32 %v294, %v488
      %v490 = vpop.f32.mrb[0].mxu0
      %v491 = vadd.f32 %v298, %v490
      %492 = vmatprep.mubr.bf16.mxu0 0
      %493 = vmatmul.mubr.bf16.gmra.mrb[0].mxu0 %v332
      %v494 = vpop.f32.mrb[0].mxu0
      %v495 = vadd.f32 %v294, %v494
      %v496 = vpop.f32.mrb[0].mxu0
      %v497 = vadd.f32 %v298, %v496
      %v498 = vpop.f32.mrb[0].mxu0
      %v499 = vadd.f32 %v294, %v498
      %v500 = vpop.f32.mrb[0].mxu0
      %v501 = vadd.f32 %v298, %v500
      %502 = vmatprep.mubr.bf16.mxu0 0
      %503 = vmatmul.mubr.bf16.gmra.mrb[0].mxu0 %v335
      %v504 = vpop.f32.mrb[0].mxu0
      %v505 = vadd.f32 %v294, %v504
      %v506 = vpop.f32.mrb[0].mxu0
      %v507 = vadd.f32 %v298, %v506
      %v508 = vpop.f32.mrb[0].mxu0
      %v509 = vadd.f32 %v294, %v508
      %v510 = vpop.f32.mrb[0].mxu0
      %v511 = vadd.f32 %v298, %v510
      %512 = vmatprep.mubr.bf16.mxu0 0
      %513 = vmatmul.mubr.bf16.gmra.mrb[0].mxu0 %v338
      %v514 = vpop.f32.mrb[0].mxu0
      %v515 = vadd.f32 %v294, %v514
      %v516 = vpop.f32.mrb[0].mxu0
      %v517 = vadd.f32 %v298, %v516
      %v518 = vpop.f32.mrb[0].mxu0
      %v519 = vadd.f32 %v294, %v518
      %v520 = vpop.f32.mrb[0].mxu0
      %v521 = vadd.f32 %v298, %v520
      %522 = vmatprep.mubr.bf16.mxu0 0
      %523 = vmatmul.mubr.bf16.gmra.mrb[0].mxu0 %v341
      %v524 = vpop.f32.mrb[0].mxu0
      %v525 = vadd.f32 %v294, %v524
      %v526 = vpop.f32.mrb[0].mxu0
      %v527 = vadd.f32 %v298, %v526
      %v528 = vpop.f32.mrb[0].mxu0
      %v529 = vadd.f32 %v294, %v528
      %v530 = vpop.f32.mrb[0].mxu0
      %v531 = vadd.f32 %v298, %v530
      %532 = vmatprep.mubr.bf16.mxu0 0
      %533 = vmatmul.mubr.bf16.gmra.mrb[0].mxu0 %v344
      %v534 = vpop.f32.mrb[0].mxu0
      %v535 = vadd.f32 %v294, %v534
      %v536 = vpop.f32.mrb[0].mxu0
      %v537 = vadd.f32 %v298, %v536
      %v538 = vpop.f32.mrb[0].mxu0
      %v539 = vadd.f32 %v294, %v538
      %v540 = vpop.f32.mrb[0].mxu0
      %v541 = vadd.f32 %v298, %v540
      %542 = vmatprep.mubr.bf16.mxu0 0
      %543 = vmatmul.mubr.bf16.gmra.mrb[0].mxu0 %v347
      %v544 = vpop.f32.mrb[0].mxu0
      %v545 = vadd.f32 %v294, %v544
      %v546 = vpop.f32.mrb[0].mxu0
      %v547 = vadd.f32 %v298, %v546
      %v548 = vpop.f32.mrb[0].mxu0
      %v549 = vadd.f32 %v294, %v548
      %v550 = vpop.f32.mrb[0].mxu0
      %v551 = vadd.f32 %v298, %v550
      %552 = vmatprep.mubr.bf16.mxu0 0
      %553 = vmatmul.mubr.bf16.gmra.mrb[0].mxu0 %v350
      %v554 = vpop.f32.mrb[0].mxu0
      %v555 = vadd.f32 %v294, %v554
      %v556 = vpop.f32.mrb[0].mxu0
      %v557 = vadd.f32 %v298, %v556
      %v558 = vpop.f32.mrb[0].mxu0
      %v559 = vadd.f32 %v294, %v558
      %v560 = vpop.f32.mrb[0].mxu0
      %v561 = vadd.f32 %v298, %v560
      %562 = vmatprep.mubr.bf16.mxu0 0
      %563 = vmatmul.mubr.bf16.gmra.mrb[0].mxu0 %v353
      %v564 = vpop.f32.mrb[0].mxu0
      %v565 = vadd.f32 %v294, %v564
      %v566 = vpop.f32.mrb[0].mxu0
      %v567 = vadd.f32 %v298, %v566
      %v568 = vpop.f32.mrb[0].mxu0
      %v569 = vadd.f32 %v294, %v568
      %v570 = vpop.f32.mrb[0].mxu0
      %v571 = vadd.f32 %v298, %v570
      %572 = vmatprep.mubr.bf16.mxu0 0
      %573 = vmatmul.mubr.bf16.gmra.mrb[0].mxu0 %v356
      %v574 = vpop.f32.mrb[0].mxu0
      %v575 = vadd.f32 %v294, %v574
      %v576 = vpop.f32.mrb[0].mxu0
      %v577 = vadd.f32 %v298, %v576
      %v578 = vpop.f32.mrb[0].mxu0
      %v579 = vadd.f32 %v294, %v578
      %v580 = vpop.f32.mrb[0].mxu0
      %v581 = vadd.f32 %v298, %v580
      %582 = vmatprep.mubr.bf16.mxu0 0
      %583 = vmatmul.mubr.bf16.gmra.mrb[0].mxu0 %v359
      %v584 = vpop.f32.mrb[0].mxu0
      %v585 = vadd.f32 %v294, %v584
      %v586 = vpop.f32.mrb[0].mxu0
      %v587 = vadd.f32 %v298, %v586
      %v588 = vpop.f32.mrb[0].mxu0
      %v589 = vadd.f32 %v294, %v588
      %v590 = vpop.f32.mrb[0].mxu0
      %v591 = vadd.f32 %v298, %v590
      %592 = vmatprep.mubr.bf16.mxu0 0
      %593 = vmatmul.mubr.bf16.gmra.mrb[0].mxu0 %v362
      %v594 = vpop.f32.mrb[0].mxu0
      %v595 = vadd.f32 %v294, %v594
      %v596 = vpop.f32.mrb[0].mxu0
      %v597 = vadd.f32 %v298, %v596
      %v598 = vpop.f32.mrb[0].mxu0
      %v599 = vadd.f32 %v294, %v598
      %v600 = vpop.f32.mrb[0].mxu0
      %v601 = vadd.f32 %v298, %v600
      %602 = vmatprep.mubr.bf16.mxu0 0
      %603 = vmatmul.mubr.bf16.gmra.mrb[0].mxu0 %v365
      %v604 = vpop.f32.mrb[0].mxu0
      %v605 = vadd.f32 %v294, %v604
      %v606 = vpop.f32.mrb[0].mxu0
      %v607 = vadd.f32 %v298, %v606
      %v608 = vpop.f32.mrb[0].mxu0
      %v609 = vadd.f32 %v294, %v608
      %v610 = vpop.f32.mrb[0].mxu0
      %v611 = vadd.f32 %v298, %v610
      %612 = vmatprep.mubr.bf16.mxu0 0
      %613 = vmatmul.mubr.bf16.gmra.mrb[0].mxu0 %v368
      %v614 = vpop.f32.mrb[0].mxu0
      %v615 = vadd.f32 %v294, %v614
      %v616 = vpop.f32.mrb[0].mxu0
      %v617 = vadd.f32 %v298, %v616
      %v618 = vpop.f32.mrb[0].mxu0
      %v619 = vadd.f32 %v294, %v618
      %v620 = vpop.f32.mrb[0].mxu0
      %v621 = vadd.f32 %v298, %v620
      %622 = vmatprep.mubr.bf16.mxu0 0
      %623 = vmatmul.mubr.bf16.gmra.mrb[0].mxu0 %v371
      %v624 = vpop.f32.mrb[0].mxu0
      %v625 = vadd.f32 %v294, %v624
      %v626 = vpop.f32.mrb[0].mxu0
      %v627 = vadd.f32 %v298, %v626
      %v628 = vpop.f32.mrb[0].mxu0
      %v629 = vadd.f32 %v294, %v628
      %v630 = vpop.f32.mrb[0].mxu0
      %v631 = vadd.f32 %v298, %v630
      %632 = vmatprep.mubr.bf16.mxu0 0
      %633 = vmatmul.mubr.bf16.gmra.mrb[0].mxu0 %v374
      %v634 = vpop.f32.mrb[0].mxu0
      %v635 = vadd.f32 %v294, %v634
      %v636 = vpop.f32.mrb[0].mxu0
      %v637 = vadd.f32 %v298, %v636
      %v638 = vpop.f32.mrb[0].mxu0
      %v639 = vadd.f32 %v294, %v638
      %v640 = vpop.f32.mrb[0].mxu0
      %v641 = vadd.f32 %v298, %v640
      %642 = vmatprep.mubr.bf16.mxu0 0
      %643 = vmatmul.mubr.bf16.gmra.mrb[0].mxu0 %v377
      %v644 = vpop.f32.mrb[0].mxu0
      %v645 = vadd.f32 %v294, %v644
      %v646 = vpop.f32.mrb[0].mxu0
      %v647 = vadd.f32 %v298, %v646
      %v648 = vpop.f32.mrb[0].mxu0
      %v649 = vadd.f32 %v294, %v648
      %v650 = vpop.f32.mrb[0].mxu0
      %v651 = vadd.f32 %v298, %v650
      %652 = vmatprep.mubr.bf16.mxu0 0
      %653 = vmatmul.mubr.bf16.gmra.mrb[0].mxu0 %v380
      %v654 = vpop.f32.mrb[0].mxu0
      %v655 = vadd.f32 %v294, %v654
      %v656 = vpop.f32.mrb[0].mxu0
      %v657 = vadd.f32 %v298, %v656
      %v658 = vpop.f32.mrb[0].mxu0
      %v659 = vadd.f32 %v294, %v658
      %v660 = vpop.f32.mrb[0].mxu0
      %v661 = vadd.f32 %v298, %v660
      %662 = vmatprep.mubr.bf16.mxu0 0
      %663 = vmatmul.mubr.bf16.gmra.mrb[0].mxu0 %v383
      %v664 = vpop.f32.mrb[0].mxu0
      %v665 = vadd.f32 %v294, %v664
      %v666 = vpop.f32.mrb[0].mxu0
      %v667 = vadd.f32 %v298, %v666
      %v668 = vpop.f32.mrb[0].mxu0
      %v669 = vadd.f32 %v294, %v668
      %v670 = vpop.f32.mrb[0].mxu0
      %v671 = vadd.f32 %v298, %v670
      %672 = vmatprep.mubr.bf16.mxu0 0
      %673 = vmatmul.mubr.bf16.gmra.mrb[0].mxu0 %v386
      %v674 = vpop.f32.mrb[0].mxu0
      %v675 = vadd.f32 %v294, %v674
      %v676 = vpop.f32.mrb[0].mxu0
      %v677 = vadd.f32 %v298, %v676
      %v678 = vpop.f32.mrb[0].mxu0
      %v679 = vadd.f32 %v294, %v678
      %v680 = vpop.f32.mrb[0].mxu0
      %v681 = vadd.f32 %v298, %v680
      %682 = vmatprep.mubr.bf16.mxu0 0
      %683 = vmatmul.mubr.bf16.gmra.mrb[0].mxu0 %v389
      %v684 = vpop.f32.mrb[0].mxu0
      %v685 = vadd.f32 %v294, %v684
      %v686 = vpop.f32.mrb[0].mxu0
      %v687 = vadd.f32 %v298, %v686
      %v688 = vpop.f32.mrb[0].mxu0
      %v689 = vadd.f32 %v294, %v688
      %v690 = vpop.f32.mrb[0].mxu0
      %v691 = vadd.f32 %v298, %v690
      %692 = vmatprep.mubr.bf16.mxu0 0
      %693 = vmatmul.mubr.bf16.gmra.mrb[0].mxu0 %v392
      %v694 = vpop.f32.mrb[0].mxu0
      %v695 = vadd.f32 %v294, %v694
      %v696 = vpop.f32.mrb[0].mxu0
      %v697 = vadd.f32 %v298, %v696
      %v698 = vpop.f32.mrb[0].mxu0
      %v699 = vadd.f32 %v294, %v698
      %v700 = vpop.f32.mrb[0].mxu0
      %v701 = vadd.f32 %v298, %v700
      %702 = vmatprep.mubr.bf16.mxu0 0
      %703 = vmatmul.mubr.bf16.gmra.mrb[0].mxu0 %v395
      %v704 = vpop.f32.mrb[0].mxu0
      %v705 = vadd.f32 %v294, %v704
      %v706 = vpop.f32.mrb[0].mxu0
      %v707 = vadd.f32 %v298, %v706
      %v708 = vpop.f32.mrb[0].mxu0
      %v709 = vadd.f32 %v294, %v708
      %v710 = vpop.f32.mrb[0].mxu0
      %v711 = vadd.f32 %v298, %v710
      %712 = vmatprep.mubr.bf16.mxu0 0
      %713 = vmatmul.mubr.bf16.gmra.mrb[0].mxu0 %v398
      %v714 = vpop.f32.mrb[0].mxu0
      %v715 = vadd.f32 %v294, %v714
      %v716 = vpop.f32.mrb[0].mxu0
      %v717 = vadd.f32 %v298, %v716
      %v718 = vpop.f32.mrb[0].mxu0
      %v719 = vadd.f32 %v294, %v718
      %v720 = vpop.f32.mrb[0].mxu0
      %v721 = vadd.f32 %v298, %v720
      %722 = vmatprep.mubr.bf16.mxu0 0
      %723 = vmatmul.mubr.bf16.gmra.mrb[0].mxu0 %v401
      %v724 = vpop.f32.mrb[0].mxu0
      %v725 = vadd.f32 %v294, %v724
      %v726 = vpop.f32.mrb[0].mxu0
      %v727 = vadd.f32 %v298, %v726
      %v728 = vpop.f32.mrb[0].mxu0
      %v729 = vadd.f32 %v294, %v728
      %v730 = vpop.f32.mrb[0].mxu0
      %v731 = vadd.f32 %v298, %v730
      %732 = vmatprep.mubr.bf16.mxu0 0
      %733 = vmatmul.mubr.bf16.gmra.mrb[0].mxu0 %v404
      %v734 = vpop.f32.mrb[0].mxu0
      %v735 = vadd.f32 %v294, %v734
      %v736 = vpop.f32.mrb[0].mxu0
      %v737 = vadd.f32 %v298, %v736
      %v738 = vpop.f32.mrb[0].mxu0
      %v739 = vadd.f32 %v294, %v738
      %v740 = vpop.f32.mrb[0].mxu0
      %v741 = vadd.f32 %v298, %v740
      %742 = vmatprep.mubr.bf16.mxu0 0
      %743 = vmatmul.mubr.bf16.gmra.mrb[0].mxu0 %v407
      %v744 = vpop.f32.mrb[0].mxu0
      %v745 = vadd.f32 %v294, %v744
      %v746 = vpop.f32.mrb[0].mxu0
      %v747 = vadd.f32 %v298, %v746
      %v748 = vpop.f32.mrb[0].mxu0
      %v749 = vadd.f32 %v294, %v748
      %v750 = vpop.f32.mrb[0].mxu0
      %v751 = vadd.f32 %v298, %v750
      %752 = vmatprep.mubr.bf16.mxu0 0
      %753 = vmatmul.mubr.bf16.gmra.mrb[0].mxu0 %v410
      %v754 = vpop.f32.mrb[0].mxu0
      %v755 = vadd.f32 %v294, %v754
      %v756 = vpop.f32.mrb[0].mxu0
      %v757 = vadd.f32 %v298, %v756
      %v758 = vpop.f32.mrb[0].mxu0
      %v759 = vadd.f32 %v294, %v758
      %v760 = vpop.f32.mrb[0].mxu0
      %v761 = vadd.f32 %v298, %v760
      %762 = vmatprep.mubr.bf16.mxu0 0
      %763 = vmatmul.mubr.bf16.gmra.mrb[0].mxu0 %v413
      %v764 = vpop.f32.mrb[0].mxu0
      %v765 = vadd.f32 %v294, %v764
      %v766 = vpop.f32.mrb[0].mxu0
      %v767 = vadd.f32 %v298, %v766
      %v768 = vpop.f32.mrb[0].mxu0
      %v769 = vadd.f32 %v294, %v768
      %v770 = vpop.f32.mrb[0].mxu0
      %v771 = vadd.f32 %v298, %v770
      %772 = vmatprep.mubr.bf16.mxu0 0
      %773 = vmatmul.mubr.bf16.gmra.mrb[0].mxu0 %v416
      %v774 = vpop.f32.mrb[0].mxu0
      %v775 = vadd.f32 %v294, %v774
      %v776 = vpop.f32.mrb[0].mxu0
      %v777 = vadd.f32 %v298, %v776
      %v778 = vpop.f32.mrb[0].mxu0
      %v779 = vadd.f32 %v294, %v778
      %v780 = vpop.f32.mrb[0].mxu0
      %v781 = vadd.f32 %v298, %v780
      %782 = vmatprep.mubr.bf16.mxu0 0
      %783 = vmatmul.mubr.bf16.gmra.mrb[0].mxu0 %v419
      %v784 = vpop.f32.mrb[0].mxu0
      %v785 = vadd.f32 %v294, %v784
      %v786 = vpop.f32.mrb[0].mxu0
      %v787 = vadd.f32 %v298, %v786
      %v788 = vpop.f32.mrb[0].mxu0
      %v789 = vadd.f32 %v294, %v788
      %v790 = vpop.f32.mrb[0].mxu0
      %v791 = vadd.f32 %v298, %v790
      %792 = vmatprep.mubr.bf16.mxu0 0
      %793 = vmatmul.mubr.bf16.gmra.mrb[0].mxu0 %v422
      %v794 = vpop.f32.mrb[0].mxu0
      %v795 = vadd.f32 %v294, %v794
      %v796 = vpop.f32.mrb[0].mxu0
      %v797 = vadd.f32 %v298, %v796
      %v798 = vpop.f32.mrb[0].mxu0
      %v799 = vadd.f32 %v294, %v798
      %v800 = vpop.f32.mrb[0].mxu0
      %v801 = vadd.f32 %v298, %v800
      %802 = vmatprep.mubr.bf16.mxu0 0
      %803 = vmatmul.mubr.bf16.gmra.mrb[0].mxu0 %v425
      %v804 = vpop.f32.mrb[0].mxu0
      %v805 = vadd.f32 %v294, %v804
      %v806 = vpop.f32.mrb[0].mxu0
      %v807 = vadd.f32 %v298, %v806
      %v808 = vpop.f32.mrb[0].mxu0
      %v809 = vadd.f32 %v294, %v808
      %v810 = vpop.f32.mrb[0].mxu0
      %v811 = vadd.f32 %v298, %v810
      %812 = vmatprep.mubr.bf16.mxu0 0
      %813 = vmatmul.mubr.bf16.gmra.mrb[0].mxu0 %v428
      %v814 = vpop.f32.mrb[0].mxu0
      %v815 = vadd.f32 %v294, %v814
      %v816 = vpop.f32.mrb[0].mxu0
      %v817 = vadd.f32 %v298, %v816
      %v818 = vpop.f32.mrb[0].mxu0
      %v819 = vadd.f32 %v294, %v818
      %v820 = vpop.f32.mrb[0].mxu0
      %v821 = vadd.f32 %v298, %v820
      %822 = vdwg.mxu0
      %823 = vst [vmem:[%s174] sm:$0xff] %v465
      %824 = vst.msk [vmem:[%s174 + $0x8] sm:$0xff] %vm321, %v467
      %825 = vst [vmem:[%s174 + $0x10] sm:$0xff] %v469
      %826 = vst.msk [vmem:[%s174 + $0x18] sm:$0xff] %vm321, %v471
      %827 = vst [vmem:[%s174 + $0x20] sm:$0xff] %v475
      %828 = vst.msk [vmem:[%s174 + $0x28] sm:$0xff] %vm321, %v477
      %829 = vst [vmem:[%s174 + $0x30] sm:$0xff] %v479
      %830 = vst.msk [vmem:[%s174 + $0x38] sm:$0xff] %vm321, %v481
      %831 = vst [vmem:[%s174 + $0x40] sm:$0xff] %v485
      %832 = vst.msk [vmem:[%s174 + $0x48] sm:$0xff] %vm321, %v487
      %833 = vst [vmem:[%s174 + $0x50] sm:$0xff] %v489
      %834 = vst.msk [vmem:[%s174 + $0x58] sm:$0xff] %vm321, %v491
      %835 = vst [vmem:[%s174 + $0x60] sm:$0xff] %v495
      %836 = vst.msk [vmem:[%s174 + $0x68] sm:$0xff] %vm321, %v497
      %837 = vst [vmem:[%s174 + $0x70] sm:$0xff] %v499
      %838 = vst.msk [vmem:[%s174 + $0x78] sm:$0xff] %vm321, %v501
      %839 = vst [vmem:[%s174 + $0x80] sm:$0xff] %v505
      %840 = vst.msk [vmem:[%s174 + $0x88] sm:$0xff] %vm321, %v507
      %841 = vst [vmem:[%s174 + $0x90] sm:$0xff] %v509
      %842 = vst.msk [vmem:[%s174 + $0x98] sm:$0xff] %vm321, %v511
      %843 = vst [vmem:[%s174 + $0xa0] sm:$0xff] %v515
      %844 = vst.msk [vmem:[%s174 + $0xa8] sm:$0xff] %vm321, %v517
      %845 = vst [vmem:[%s174 + $0xb0] sm:$0xff] %v519
      %846 = vst.msk [vmem:[%s174 + $0xb8] sm:$0xff] %vm321, %v521
      %847 = vst [vmem:[%s174 + $0xc0] sm:$0xff] %v525
      %848 = vst.msk [vmem:[%s174 + $0xc8] sm:$0xff] %vm321, %v527
      %849 = vst [vmem:[%s174 + $0xd0] sm:$0xff] %v529
      %850 = vst.msk [vmem:[%s174 + $0xd8] sm:$0xff] %vm321, %v531
      %851 = vst [vmem:[%s174 + $0xe0] sm:$0xff] %v535
      %852 = vst.msk [vmem:[%s174 + $0xe8] sm:$0xff] %vm321, %v537
      %853 = vst [vmem:[%s174 + $0xf0] sm:$0xff] %v539
      %854 = vst.msk [vmem:[%s174 + $0xf8] sm:$0xff] %vm321, %v541
      %855 = vst [vmem:[%s174 + $0x100] sm:$0xff] %v545
      %856 = vst.msk [vmem:[%s174 + $0x108] sm:$0xff] %vm321, %v547
      %857 = vst [vmem:[%s174 + $0x110] sm:$0xff] %v549
      %858 = vst.msk [vmem:[%s174 + $0x118] sm:$0xff] %vm321, %v551
      %859 = vst [vmem:[%s174 + $0x120] sm:$0xff] %v555
      %860 = vst.msk [vmem:[%s174 + $0x128] sm:$0xff] %vm321, %v557
      %861 = vst [vmem:[%s174 + $0x130] sm:$0xff] %v559
      %862 = vst.msk [vmem:[%s174 + $0x138] sm:$0xff] %vm321, %v561
      %863 = vst [vmem:[%s174 + $0x140] sm:$0xff] %v565
      %864 = vst.msk [vmem:[%s174 + $0x148] sm:$0xff] %vm321, %v567
      %865 = vst [vmem:[%s174 + $0x150] sm:$0xff] %v569
      %866 = vst.msk [vmem:[%s174 + $0x158] sm:$0xff] %vm321, %v571
      %867 = vst [vmem:[%s174 + $0x160] sm:$0xff] %v575
      %868 = vst.msk [vmem:[%s174 + $0x168] sm:$0xff] %vm321, %v577
      %869 = vst [vmem:[%s174 + $0x170] sm:$0xff] %v579
      %870 = vst.msk [vmem:[%s174 + $0x178] sm:$0xff] %vm321, %v581
      %871 = vst [vmem:[%s174 + $0x180] sm:$0xff] %v585
      %872 = vst.msk [vmem:[%s174 + $0x188] sm:$0xff] %vm321, %v587
      %873 = vst [vmem:[%s174 + $0x190] sm:$0xff] %v589
      %874 = vst.msk [vmem:[%s174 + $0x198] sm:$0xff] %vm321, %v591
      %875 = vst [vmem:[%s174 + $0x1a0] sm:$0xff] %v595
      %876 = vst.msk [vmem:[%s174 + $0x1a8] sm:$0xff] %vm321, %v597
      %877 = vst [vmem:[%s174 + $0x1b0] sm:$0xff] %v599
      %878 = vst.msk [vmem:[%s174 + $0x1b8] sm:$0xff] %vm321, %v601
      %879 = vst [vmem:[%s174 + $0x1c0] sm:$0xff] %v605
      %880 = vst.msk [vmem:[%s174 + $0x1c8] sm:$0xff] %vm321, %v607
      %881 = vst [vmem:[%s174 + $0x1d0] sm:$0xff] %v609
      %882 = vst.msk [vmem:[%s174 + $0x1d8] sm:$0xff] %vm321, %v611
      %883 = vst [vmem:[%s174 + $0x1e0] sm:$0xff] %v615
      %884 = vst.msk [vmem:[%s174 + $0x1e8] sm:$0xff] %vm321, %v617
      %885 = vst [vmem:[%s174 + $0x1f0] sm:$0xff] %v619
      %886 = vst.msk [vmem:[%s174 + $0x1f8] sm:$0xff] %vm321, %v621
      %887 = vst [vmem:[%s174 + $0x200] sm:$0xff] %v625
      %888 = vst.msk [vmem:[%s174 + $0x208] sm:$0xff] %vm321, %v627
      %889 = vst [vmem:[%s174 + $0x210] sm:$0xff] %v629
      %890 = vst.msk [vmem:[%s174 + $0x218] sm:$0xff] %vm321, %v631
      %891 = vst [vmem:[%s174 + $0x220] sm:$0xff] %v635
      %892 = vst.msk [vmem:[%s174 + $0x228] sm:$0xff] %vm321, %v637
      %893 = vst [vmem:[%s174 + $0x230] sm:$0xff] %v639
      %894 = vst.msk [vmem:[%s174 + $0x238] sm:$0xff] %vm321, %v641
      %895 = vst [vmem:[%s174 + $0x240] sm:$0xff] %v645
      %896 = vst.msk [vmem:[%s174 + $0x248] sm:$0xff] %vm321, %v647
      %897 = vst [vmem:[%s174 + $0x250] sm:$0xff] %v649
      %898 = vst.msk [vmem:[%s174 + $0x258] sm:$0xff] %vm321, %v651
      %899 = vst [vmem:[%s174 + $0x260] sm:$0xff] %v655
      %900 = vst.msk [vmem:[%s174 + $0x268] sm:$0xff] %vm321, %v657
      %901 = vst [vmem:[%s174 + $0x270] sm:$0xff] %v659
      %902 = vst.msk [vmem:[%s174 + $0x278] sm:$0xff] %vm321, %v661
      %903 = vst [vmem:[%s174 + $0x280] sm:$0xff] %v665
      %904 = vst.msk [vmem:[%s174 + $0x288] sm:$0xff] %vm321, %v667
      %905 = vst [vmem:[%s174 + $0x290] sm:$0xff] %v669
      %906 = vst.msk [vmem:[%s174 + $0x298] sm:$0xff] %vm321, %v671
      %907 = vst [vmem:[%s174 + $0x2a0] sm:$0xff] %v675
      %908 = vst.msk [vmem:[%s174 + $0x2a8] sm:$0xff] %vm321, %v677
      %909 = vst [vmem:[%s174 + $0x2b0] sm:$0xff] %v679
      %910 = vst.msk [vmem:[%s174 + $0x2b8] sm:$0xff] %vm321, %v681
      %911 = vst [vmem:[%s174 + $0x2c0] sm:$0xff] %v685
      %912 = vst.msk [vmem:[%s174 + $0x2c8] sm:$0xff] %vm321, %v687
      %913 = vst [vmem:[%s174 + $0x2d0] sm:$0xff] %v689
      %914 = vst.msk [vmem:[%s174 + $0x2d8] sm:$0xff] %vm321, %v691
      %915 = vst [vmem:[%s174 + $0x2e0] sm:$0xff] %v695
      %916 = vst.msk [vmem:[%s174 + $0x2e8] sm:$0xff] %vm321, %v697
      %917 = vst [vmem:[%s174 + $0x2f0] sm:$0xff] %v699
      %918 = vst.msk [vmem:[%s174 + $0x2f8] sm:$0xff] %vm321, %v701
      %919 = vst [vmem:[%s174 + $0x300] sm:$0xff] %v705
      %920 = vst.msk [vmem:[%s174 + $0x308] sm:$0xff] %vm321, %v707
      %921 = vst [vmem:[%s174 + $0x310] sm:$0xff] %v709
      %922 = vst.msk [vmem:[%s174 + $0x318] sm:$0xff] %vm321, %v711
      %923 = vst [vmem:[%s174 + $0x320] sm:$0xff] %v715
      %924 = vst.msk [vmem:[%s174 + $0x328] sm:$0xff] %vm321, %v717
      %925 = vst [vmem:[%s174 + $0x330] sm:$0xff] %v719
      %926 = vst.msk [vmem:[%s174 + $0x338] sm:$0xff] %vm321, %v721
      %927 = vst [vmem:[%s174 + $0x340] sm:$0xff] %v725
      %928 = vst.msk [vmem:[%s174 + $0x348] sm:$0xff] %vm321, %v727
      %929 = vst [vmem:[%s174 + $0x350] sm:$0xff] %v729
      %930 = vst.msk [vmem:[%s174 + $0x358] sm:$0xff] %vm321, %v731
      %931 = vst [vmem:[%s174 + $0x360] sm:$0xff] %v735
      %932 = vst.msk [vmem:[%s174 + $0x368] sm:$0xff] %vm321, %v737
      %933 = vst [vmem:[%s174 + $0x370] sm:$0xff] %v739
      %934 = vst.msk [vmem:[%s174 + $0x378] sm:$0xff] %vm321, %v741
      %935 = vst [vmem:[%s174 + $0x380] sm:$0xff] %v745
      %936 = vst.msk [vmem:[%s174 + $0x388] sm:$0xff] %vm321, %v747
      %937 = vst [vmem:[%s174 + $0x390] sm:$0xff] %v749
      %938 = vst.msk [vmem:[%s174 + $0x398] sm:$0xff] %vm321, %v751
      %939 = vst [vmem:[%s174 + $0x3a0] sm:$0xff] %v755
      %940 = vst.msk [vmem:[%s174 + $0x3a8] sm:$0xff] %vm321, %v757
      %941 = vst [vmem:[%s174 + $0x3b0] sm:$0xff] %v759
      %942 = vst.msk [vmem:[%s174 + $0x3b8] sm:$0xff] %vm321, %v761
      %943 = vst [vmem:[%s174 + $0x3c0] sm:$0xff] %v765
      %944 = vst.msk [vmem:[%s174 + $0x3c8] sm:$0xff] %vm321, %v767
      %945 = vst [vmem:[%s174 + $0x3d0] sm:$0xff] %v769
      %946 = vst.msk [vmem:[%s174 + $0x3d8] sm:$0xff] %vm321, %v771
      %947 = vst [vmem:[%s174 + $0x3e0] sm:$0xff] %v775
      %948 = vst.msk [vmem:[%s174 + $0x3e8] sm:$0xff] %vm321, %v777
      %949 = vst [vmem:[%s174 + $0x3f0] sm:$0xff] %v779
      %950 = vst.msk [vmem:[%s174 + $0x3f8] sm:$0xff] %vm321, %v781
      %951 = vst [vmem:[%s174 + $0x400] sm:$0xff] %v785
      %952 = vst.msk [vmem:[%s174 + $0x408] sm:$0xff] %vm321, %v787
      %953 = vst [vmem:[%s174 + $0x410] sm:$0xff] %v789
      %954 = vst.msk [vmem:[%s174 + $0x418] sm:$0xff] %vm321, %v791
      %955 = vst [vmem:[%s174 + $0x420] sm:$0xff] %v795
      %956 = vst.msk [vmem:[%s174 + $0x428] sm:$0xff] %vm321, %v797
      %957 = vst [vmem:[%s174 + $0x430] sm:$0xff] %v799
      %958 = vst.msk [vmem:[%s174 + $0x438] sm:$0xff] %vm321, %v801
      %959 = vst [vmem:[%s174 + $0x440] sm:$0xff] %v805
      %960 = vst.msk [vmem:[%s174 + $0x448] sm:$0xff] %vm321, %v807
      %961 = vst [vmem:[%s174 + $0x450] sm:$0xff] %v809
      %962 = vst.msk [vmem:[%s174 + $0x458] sm:$0xff] %vm321, %v811
      %963 = vst [vmem:[%s174 + $0x460] sm:$0xff] %v815
      %964 = vst.msk [vmem:[%s174 + $0x468] sm:$0xff] %vm321, %v817
      %965 = vst [vmem:[%s174 + $0x470] sm:$0xff] %v819
      %966 = vst.msk [vmem:[%s174 + $0x478] sm:$0xff] %vm321, %v821
      %s967 = smul.u32 72, %s14
      %p968 = scmp.lt.s32.totalorder %s967, 287
      %s969 = scalar_select %p968, %s967, 287
      %s970 = smul.addr %s969, 2
      %s971 = smul.addr %s970, 8
      %s972 = scalar_lea.vmem %s3, %s971
      // Predicated region
      $region33: #{tpu_custom_call.1} parent=31 // pred_check
        %p973 = pneg %p100
      $region34: #{tpu_custom_call.1} parent=31 // pred_check_branch
        %975 = sbr.rel (%p973) target = $region36
      $region35: #{tpu_custom_call.1} parent=31 // pred_region
        %s976 = smul.u32 72, %s14
      $region36: #{tpu_custom_call.1} parent=31 // pred_fallthru
        _
    $region32: #{tpu_custom_call.1} parent=5 // pred_fallthru
      _
    %p977 = scmp.le.s32.totalorder 2, %s9
    // Predicated region
    $region37: #{tpu_custom_call.1} parent=5 // pred_check
      %p978 = pneg %p977
    $region38: #{tpu_custom_call.1} parent=5 // pred_check_branch
      %980 = sbr.rel (%p978) target = $region40
    $region39: #{tpu_custom_call.1} parent=5 // pred_region
      %s981 = ssub.s32 %s9, 2
      // Predicated region
      $region41: #{tpu_custom_call.1} parent=39 // pred_check
        %p982 = pneg %p106
      $region42: #{tpu_custom_call.1} parent=39 // pred_check_branch
        %984 = sbr.rel (%p982) target = $region44
      $region43: #{tpu_custom_call.1} parent=39 // pred_region
        %s985 = smul.u32 72, %s15
        %p986 = scmp.lt.s32.totalorder %s985, 287
        %s987 = scalar_select %p986, %s985, 287
        %s988 = smul.addr %s987, 2
        %s989 = smul.addr %s988, 8
        %s990 = scalar_lea.vmem %s3, %s989
      $region44: #{tpu_custom_call.1} parent=39 // pred_fallthru
        _
    $region40: #{tpu_custom_call.1} parent=5 // pred_fallthru
      _
  $region6: #{tpu_custom_call.1} parent=0 // loop_footer
    %s13 = sadd.s32 1, %s9
  $region7: #{tpu_custom_call.1} parent=0 // loop_footer_branch
    %8 = sbr.rel target = $region3
  $region8: #{tpu_custom_call.1} parent=0 // loop_exit
    _

</llo_original>
